<compile_context>
chip_gen: v7x
topology: tpu7x:2x2x1
jax: 0.10.0
libtpu: 0.0.40
codegen_flags: <defaults>
</compile_context>

<pallas_src>
import functools

import jax
import jax.numpy as jnp
from jax.experimental import pallas as pl
from jax.experimental.pallas import tpu as pltpu

_LANE = 128      # lane (last-dim) granule
_SUBLANE = 16    # M-tile granule (bf16-friendly sublane packing)


def _cdiv(a: int, b: int) -> int:
    return -(-a // b)


def _round_up(v: int, m: int) -> int:
    return _cdiv(v, m) * m


def _linear_bias_kernel(x_ref, w_ref, b_ref, o_ref):
    # x_ref: (TM, Kp)    w_ref: (Kp, TN)  (VMEM resident when grid_n == 1)
    # b_ref: (1, TN) f32 o_ref: (TM, TN)
    acc = jnp.dot(x_ref[...], w_ref[...], preferred_element_type=jnp.float32)
    o_ref[...] = (acc + b_ref[...]).astype(o_ref.dtype)


def _vmem_capacity_bytes() -> int:
    try:
        return int(pltpu.get_tpu_info().vmem_capacity_bytes)
    except Exception:
        return 64 << 20      # conservative default: v7x per-TensorCore VMEM


@functools.partial(jax.jit, static_argnames=("block_m",))
def projection_head(x, weight_t, bias, *, block_m: int = 512):
    """y = x @ weight_t + bias  (nn.Linear forward, weight pre-transposed).

    x:        [M, K]  (batch, embedding_dim)
    weight_t: [K, N]  (embedding_dim, projection_dim) == W^T of nn.Linear
    bias:     [N]
    returns:  [M, N] in x.dtype
    """
    M, K = x.shape
    K2, N = weight_t.shape
    assert K == K2, (K, K2)
    out_dtype = x.dtype

    # Tiny or heavily-padded problems: pallas_call launch + pad overhead beats
    # any kernel win; XLA's fused GEMM is strictly faster here.
    if M * K * N < (1 << 18) or K < _LANE or N < _LANE:
        y = jnp.dot(x, weight_t, preferred_element_type=jnp.float32)
        return (y + bias.astype(jnp.float32)).astype(out_dtype)

    Kp = _round_up(K, _LANE)
    Np = _round_up(N, _LANE)

    # Fast path: no pad / cast copies when K, N are already lane-aligned.
    if Kp == K:
        xp = x
    else:
        xp = jnp.zeros((M, Kp), x.dtype).at[:, :K].set(x)
    if Kp == K and Np == N:
        wp = weight_t
    else:
        wp = jnp.zeros((Kp, Np), weight_t.dtype).at[:K, :N].set(weight_t)
    if Np == N:
        bp = bias.astype(jnp.float32).reshape(1, N)
    else:
        bp = jnp.zeros((1, Np), jnp.float32).at[0, :N].set(
            bias.astype(jnp.float32))

    x_item = jnp.dtype(xp.dtype).itemsize
    w_item = jnp.dtype(wp.dtype).itemsize
    o_item = jnp.dtype(out_dtype).itemsize

    # ---- generation-aware VMEM budget & tiling ------------------------------
    vmem_cap = _vmem_capacity_bytes()
    budget = max(vmem_cap - (8 << 20), 16 << 20)   # Mosaic scratch headroom

    # N tiling: keep the full weight resident (single-buffered) unless it eats
    # more than half of the budget; otherwise stream (Kp, TN) strips.
    if Kp * Np * w_item <= budget // 2:
        TN, w_bufs = Np, 1                     # resident: block index constant
    else:
        w_bufs = 2
        TN = (budget // 2) // (w_bufs * Kp * w_item)
        TN = min(max((TN // _LANE) * _LANE, _LANE), Np)
    grid_n = _cdiv(Np, TN)
    resident = grid_n == 1

    # TODO(synk): add a K grid axis + f32 VMEM accumulator for embedding dims
    # so large that even a (Kp, 128) weight strip overflows the VMEM budget.

    # M tiling from the remaining budget (x and output tiles double-buffered).
    rem = budget - w_bufs * Kp * TN * w_item - 2 * TN * 4
    per_row = 2 * (Kp * x_item + TN * o_item)
    tm_cap = max(rem // per_row, _SUBLANE)
    TM = min(block_m, int(tm_cap), _round_up(M, _SUBLANE))
    if resident and TM >= M and M > _SUBLANE:
        # Split the batch into >= 2 tiles so both v7x TensorCores get work.
        TM = _cdiv(M, 2)
    TM = max(_round_up(TM, _SUBLANE), _SUBLANE)
    grid_m = _cdiv(M, TM)

    if resident:
        w_spec = pl.BlockSpec((Kp, TN), lambda j, i: (0, j),
                              pipeline_mode=pl.Buffered(1))
        b_spec = pl.BlockSpec((1, TN), lambda j, i: (0, j),
                              pipeline_mode=pl.Buffered(1))
    else:
        w_spec = pl.BlockSpec((Kp, TN), lambda j, i: (0, j))
        b_spec = pl.BlockSpec((1, TN), lambda j, i: (0, j))

    working = (w_bufs * Kp * TN * w_item + 2 * TM * Kp * x_item
               + 2 * TM * TN * o_item + 2 * TN * 4)
    vmem_limit = int(min(max(working + (6 << 20), 32 << 20),
                         vmem_cap - (2 << 20)))

    cost = pl.CostEstimate(
        flops=2 * M * Kp * Np,
        transcendentals=0,
        bytes_accessed=(grid_n * M * Kp * x_item + Kp * Np * w_item
                        + M * Np * o_item + Np * 4),
    )

    out_padded = pl.pallas_call(
        _linear_bias_kernel,
        out_shape=jax.ShapeDtypeStruct((M, Np), out_dtype),
        grid_spec=pltpu.PrefetchScalarGridSpec(
            num_scalar_prefetch=0,
            # N outer so a weight strip is fetched once and reused across all
            # M tiles; M inner streams x / y tiles through the pipeline.
            grid=(grid_n, grid_m),
            in_specs=[
                pl.BlockSpec((TM, Kp), lambda j, i: (i, 0)),   # x streams
                w_spec,                                        # W resident/strip
                b_spec,                                        # bias
            ],
            out_specs=pl.BlockSpec((TM, TN), lambda j, i: (i, j)),
        ),
        compiler_params=pltpu.CompilerParams(
            dimension_semantics=("parallel", "parallel"),
            vmem_limit_bytes=vmem_limit,
        ),
        cost_estimate=cost,
    )(xp, wp, bp)

    if Np != N:
        out_padded = out_padded[:, :N]
    return out_padded


if __name__ == "__main__":
    key = jax.random.PRNGKey(0)

    def make_case(case_key, m, k, n):
        kx, kw, kb = jax.random.split(case_key, 3)
        xv = jax.random.normal(kx, (m, k), dtype=jnp.float32)
        bound = 1.0 / (k ** 0.5)
        wv = jax.random.uniform(kw, (k, n), minval=-bound, maxval=bound,
                                dtype=jnp.float32)
        bv = jax.random.uniform(kb, (n,), minval=-bound, maxval=bound,
                                dtype=jnp.float32)
        return xv, wv, bv

    cases = [
        (64, 256, 128),   # lane-aligned  -> Pallas fast path (no pad copies)
        (40, 192, 160),   # unaligned K/N + ragged last M tile -> padded path
        (8, 32, 64),      # tiny          -> XLA fallback
    ]

    for idx, (M, K, N) in enumerate(cases):
        key, sub = jax.random.split(key)
        x, weight_t, bias = make_case(sub, M, K, N)
        out = jax.block_until_ready(projection_head(x, weight_t, bias))
        ref = jnp.dot(x, weight_t,
                      precision=jax.lax.Precision.HIGHEST) + bias
        assert out.shape == (M, N), (idx, out.shape)
        assert out.dtype == x.dtype, (idx, out.dtype)
        assert jnp.allclose(out, ref, atol=2e-2, rtol=2e-2), (
            idx, float(jnp.max(jnp.abs(out - ref))))

    print("KERNEL_OK")
</pallas_src>

<mosaic_0001>
module attributes {stable_mosaic.version = 11 : i64} {
  func.func @_linear_bias_kernel(%arg0: i32, %arg1: i32, %arg2: memref<32x256xf32, #tpu.memory_space<vmem>>, %arg3: memref<256x128xf32, #tpu.memory_space<vmem>>, %arg4: memref<1x128xf32, #tpu.memory_space<vmem>>, %arg5: memref<32x128xf32, #tpu.memory_space<vmem>>) attributes {dimension_semantics = [#tpu.dimension_semantics<parallel>, #tpu.dimension_semantics<parallel>], iteration_bounds = array<i64: 1, 2>, scalar_prefetch = 0 : i64, scratch_operands = 0 : i64, tpu.core_type = #tpu.core_type<tc>, window_params = [{transform_indices = @transform_0, window_bounds = array<i64: 32, 256>}, {pipeline_mode = #tpu.pipeline_mode<synchronous>, transform_indices = @transform_1, window_bounds = array<i64: 256, 128>}, {pipeline_mode = #tpu.pipeline_mode<synchronous>, transform_indices = @transform_2, window_bounds = array<i64: 1, 128>}, {transform_indices = @transform_3, window_bounds = array<i64: 32, 128>}]} {
    %c0 = arith.constant 0 : index
    %c0_0 = arith.constant 0 : index
    %0 = vector.load %arg2[%c0, %c0_0] : memref<32x256xf32, #tpu.memory_space<vmem>>, vector<32x256xf32>
    %c0_1 = arith.constant 0 : index
    %c0_2 = arith.constant 0 : index
    %1 = vector.load %arg3[%c0_1, %c0_2] : memref<256x128xf32, #tpu.memory_space<vmem>>, vector<256x128xf32>
    %cst = arith.constant dense<0.000000e+00> : vector<32x128xf32>
    %2 = tpu.matmul %0, %1, %cst {dimension_numbers = #tpu.dot_dimension_numbers<[1], [0], [0], [1], [0, 0, 1, 1], [], []>} : vector<32x256xf32>, vector<256x128xf32>, vector<32x128xf32> -> vector<32x128xf32>
    %c0_3 = arith.constant 0 : index
    %c0_4 = arith.constant 0 : index
    %3 = vector.load %arg4[%c0_3, %c0_4] : memref<1x128xf32, #tpu.memory_space<vmem>>, vector<1x128xf32>
    %4 = vector.broadcast %3 : vector<1x128xf32> to vector<32x128xf32>
    %5 = arith.addf %2, %4 : vector<32x128xf32>
    %c0_5 = arith.constant 0 : index
    %c0_6 = arith.constant 0 : index
    %6 = vector.load %arg5[%c0_5, %c0_6] : memref<32x128xf32, #tpu.memory_space<vmem>>, vector<32x128xf32>
    tpu.vector_store %arg5[%c0_5, %c0_6], %5 {strides = array<i32>} : memref<32x128xf32, #tpu.memory_space<vmem>>, vector<32x128xf32>,
    return
  }
  func.func @transform_0(%arg0: i32, %arg1: i32) -> (i32, i32) {
    %c0_i32 = arith.constant 0 : i32
    %c0_i32_0 = arith.constant 0 : i32
    return %arg1, %c0_i32 : i32, i32
  }
  func.func @transform_1(%arg0: i32, %arg1: i32) -> (i32, i32) {
    %c0_i32 = arith.constant 0 : i32
    %c0_i32_0 = arith.constant 0 : i32
    return %c0_i32, %arg0 : i32, i32
  }
  func.func @transform_2(%arg0: i32, %arg1: i32) -> (i32, i32) {
    %c0_i32 = arith.constant 0 : i32
    %c0_i32_0 = arith.constant 0 : i32
    return %c0_i32, %arg0 : i32, i32
  }
  func.func @transform_3(%arg0: i32, %arg1: i32) -> (i32, i32) {
    %c0_i32 = arith.constant 0 : i32
    return %arg1, %arg0 : i32, i32
  }
}

</mosaic_0001>

<llo_original>
// kernel: projection_head.1
$region0: #{projection_head.1}
  #allocation0 [shape = 'u32[]', space=smem, size = 0x4, offset = 0x4, fixed_abs, tag = 'smem constant byte address 0x4 - core index']
  #allocation1 [shape = 'u32[144,128]{1,0:T(1,128)}', space=vmem, size = 0x12000, scoped, tag = 'internal scratch']
  %s0 = inlined_call_operand.hbm [shape: f32[64,256], index: 0, kind: input, shape index: {}]
  %s1 = inlined_call_operand.hbm [shape: f32[256,128], index: 1, kind: input, shape index: {}]
  %s2 = inlined_call_operand.vmem [shape: f32[1,128], index: 2, kind: input, shape index: {}]
  %s3 = inlined_call_operand.hbm [shape: f32[64,128], index: 3, kind: output, shape index: {}]
  %s4 = sld [smem:[#allocation0]]
  $region53: #{projection_head.1} parent=0
    _
  %s6 = ssub.s32 1, %s4
  %s7 = scalar_select 0, %s6, %s4
  $region1: #{projection_head.1} parent=0
    #allocation2 [shape = 'u8[65536]{0}', space=vmem, size = 0x10000, scoped, tag = 'input window, operand 0']
    #allocation3 [shape = 's32[2]{0}', space=sflag, size = 0x8, scoped, tag = 'scoped memory for projection_head.1']
    #allocation4 [shape = 's32[2]{0}', space=sflag, size = 0x8, scoped, tag = 'scoped memory for projection_head.1']
    #allocation5 [shape = 'u8[131072]{0}', space=vmem, size = 0x20000, scoped, tag = 'input window, operand 1, single buffered']
    #allocation6 [shape = 's32[1]{0}', space=sflag, size = 0x4, scoped, tag = 'scoped memory for projection_head.1']
    #allocation7 [shape = 'u8[32768]{0}', space=vmem, size = 0x8000, scoped, tag = 'output window, operand 0']
    %8 = vsyncpa [#allocation3], 0
    %s9 = scalar_lea.sflag [#allocation3], 1
    %10 = vsyncpa %s9, 0
    %11 = vsyncpa [#allocation6], 0
    %12 = vsyncpa [#allocation4], 0
    %s13 = scalar_lea.sflag [#allocation4], 1
    %14 = vsyncpa %s13, 0
    loop: start=0, step=1, limit=4
    $region2: #{projection_head.1} parent=1 // loop_pre_header
      _
    $region3: #{projection_head.1} parent=1 // loop_header
      %s16 = sphi 0, %s20
      %p17 = scmp.ge.s32.totalorder %s16, 4
      %s23 = sphi 0, %s35
      %s24 = sphi 0, %s31
      %s25 = sphi 0, %s23
      %s26 = sphi 0, %s24
      %s27 = sphi 0, %s25
      %s28 = sphi 0, %s26
      %s38 = sphi 0, %s40
      %s41 = sphi 0, %s38
      %s42 = sphi 0, %s41
      %s58 = sphi 0, %s42
      %s64 = sphi 0, %s66
      %s67 = sphi 0, %s64
      %s68 = sphi 0, %s67
      %s84 = sphi 0, %s68
      %s90 = sphi 0, %s92
      %s93 = sphi 0, %s90
      %s94 = sphi 0, %s93
      %s110 = sphi 0, %s94
      %s118 = sphi 0, %s120
      %s121 = sphi 0, %s118
      %s122 = sphi 0, %s121
      %s138 = sphi 0, %s122
    $region4: #{projection_head.1} parent=1 // loop_header_branch
      %19 = sbr.rel (%p17) target = $region8
    $region5: #{projection_head.1} parent=1 // loop_body
      %s21 = ssub.s32 %s16, 1
      %s22 = ssub.s32 %s16, 2
      %s29 = sadd.s32 1, %s24
      %p30 = scmp.ge.s32.totalorder %s29, 2
      %s31 = scalar_select %p30, 0, %s29
      %s32 = sadd.s32 1, %s23
      %s33 = scalar_select %p30, %s32, %s23
      %p34 = scmp.ge.s32.totalorder %s33, 1
      %s35 = scalar_select %p34, 0, %s33
      %s36 = ssub.s32 %s24, %s31
      %p37 = scmp.eq.s32.totalorder %s36, 0
      %s39 = sadd.s32 %s38, 1
      %s40 = scalar_select %p37, %s38, %s39
      %p43 = pneg %p37
      %p44 = scmp.eq.s32.totalorder %s16, 1
      %p45 = por %p43, %p44
      %p46 = scmp.ne.s32.totalorder %s38, %s41
      %p47 = scmp.eq.s32.totalorder %s16, 0
      %p48 = por %p46, %p47
      %p49 = scmp.ne.s32.totalorder %s38, %s41
      %p50 = scmp.eq.s32.totalorder %s21, 1
      %p51 = por %p49, %p50
      %p52 = scmp.ne.s32.totalorder %s41, %s42
      %p53 = scmp.eq.s32.totalorder %s21, 0
      %p54 = por %p52, %p53
      %p55 = scmp.ne.s32.totalorder %s41, %s42
      %p56 = scmp.eq.s32.totalorder %s22, 1
      %p57 = por %p55, %p56
      %p59 = scmp.ne.s32.totalorder %s42, %s58
      %p60 = scmp.eq.s32.totalorder %s22, 0
      %p61 = por %p59, %p60
      %s62 = ssub.s32 %s23, %s35
      %p63 = scmp.eq.s32.totalorder %s62, 0
      %s65 = sadd.s32 %s64, 1
      %s66 = scalar_select %p63, %s64, %s65
      %p69 = pneg %p63
      %p70 = scmp.eq.s32.totalorder %s16, 1
      %p71 = por %p69, %p70
      %p72 = scmp.ne.s32.totalorder %s64, %s67
      %p73 = scmp.eq.s32.totalorder %s16, 0
      %p74 = por %p72, %p73
      %p75 = scmp.ne.s32.totalorder %s64, %s67
      %p76 = scmp.eq.s32.totalorder %s21, 1
      %p77 = por %p75, %p76
      %p78 = scmp.ne.s32.totalorder %s67, %s68
      %p79 = scmp.eq.s32.totalorder %s21, 0
      %p80 = por %p78, %p79
      %p81 = scmp.ne.s32.totalorder %s67, %s68
      %p82 = scmp.eq.s32.totalorder %s22, 1
      %p83 = por %p81, %p82
      %p85 = scmp.ne.s32.totalorder %s68, %s84
      %p86 = scmp.eq.s32.totalorder %s22, 0
      %p87 = por %p85, %p86
      %s88 = ssub.s32 %s23, %s35
      %p89 = scmp.eq.s32.totalorder %s88, 0
      %s91 = sadd.s32 %s90, 1
      %s92 = scalar_select %p89, %s90, %s91
      %p95 = pneg %p89
      %p96 = scmp.eq.s32.totalorder %s16, 1
      %p97 = por %p95, %p96
      %p98 = scmp.ne.s32.totalorder %s90, %s93
      %p99 = scmp.eq.s32.totalorder %s16, 0
      %p100 = por %p98, %p99
      %p101 = scmp.ne.s32.totalorder %s90, %s93
      %p102 = scmp.eq.s32.totalorder %s21, 1
      %p103 = por %p101, %p102
      %p104 = scmp.ne.s32.totalorder %s93, %s94
      %p105 = scmp.eq.s32.totalorder %s21, 0
      %p106 = por %p104, %p105
      %p107 = scmp.ne.s32.totalorder %s93, %s94
      %p108 = scmp.eq.s32.totalorder %s22, 1
      %p109 = por %p107, %p108
      %p111 = scmp.ne.s32.totalorder %s94, %s110
      %p112 = scmp.eq.s32.totalorder %s22, 0
      %p113 = por %p111, %p112
      %s114 = ssub.s32 %s24, %s31
      %s115 = ssub.s32 %s23, %s35
      %s116 = sor.u32 %s114, %s115
      %p117 = scmp.eq.s32.totalorder %s116, 0
      %s119 = sadd.s32 %s118, 1
      %s120 = scalar_select %p117, %s118, %s119
      %p123 = pneg %p117
      %p124 = scmp.eq.s32.totalorder %s16, 1
      %p125 = por %p123, %p124
      %p126 = scmp.ne.s32.totalorder %s118, %s121
      %p127 = scmp.eq.s32.totalorder %s16, 0
      %p128 = por %p126, %p127
      %p129 = scmp.ne.s32.totalorder %s118, %s121
      %p130 = scmp.eq.s32.totalorder %s21, 1
      %p131 = por %p129, %p130
      %p132 = scmp.ne.s32.totalorder %s121, %s122
      %p133 = scmp.eq.s32.totalorder %s21, 0
      %p134 = por %p132, %p133
      %p135 = scmp.ne.s32.totalorder %s121, %s122
      %p136 = scmp.eq.s32.totalorder %s22, 1
      %p137 = por %p135, %p136
      %p139 = scmp.ne.s32.totalorder %s122, %s138
      %p140 = scmp.eq.s32.totalorder %s22, 0
      %p141 = por %p139, %p140
      %p142 = scmp.le.s32.totalorder 1, %s16
      %p143 = scmp.lt.s32.totalorder %s16, 3
      %p144 = pnand %p142, %p143
      %p145 = pneg %p144
      // Predicated region
      $region9: #{projection_head.1} parent=5 // pred_check
        _
      $region10: #{projection_head.1} parent=5 // pred_check_branch
        %147 = sbr.rel (%p144) target = $region12
      $region11: #{projection_head.1} parent=5 // pred_region
        %s148 = ssub.s32 %s16, 1
        // Predicated region
        $region13: #{projection_head.1} parent=11 // pred_check
          %p149 = pneg %p80
        $region14: #{projection_head.1} parent=11 // pred_check_branch
          %151 = sbr.rel (%p149) target = $region16
        $region15: #{projection_head.1} parent=11 // pred_region
          %s153 = ssub.s32 4096, 4096
          %154 = vsyncadd [#allocation6], %s153
          %s155 = smul.addr %s25, 128
          %s156 = scalar_lea.hbm %s1, %s155
          %s157 = sshll.u32 [#allocation5], 4
          %s158 = int_to_ptr.vmem [resolvable:$true] %s157
          %163 = dma.hbm_to_vmem [thread:$0]  %s156, 4096, %s158, [#allocation6], 128, 128, 8
        $region16: #{projection_head.1} parent=11 // pred_fallthru
          _
        // Predicated region
        $region17: #{projection_head.1} parent=11 // pred_check
          %p164 = pneg %p106
        $region18: #{projection_head.1} parent=11 // pred_check_branch
          %166 = sbr.rel (%p164) target = $region20
        $region19: #{projection_head.1} parent=11 // pred_region
          %p167 = scmp.lt.s32.totalorder %s25, 0
          %s168 = scalar_select %p167, %s25, 0
          %s169 = scalar_lea.vmem %s2, %s168
        $region20: #{projection_head.1} parent=11 // pred_fallthru
          _
      $region12: #{projection_head.1} parent=5 // pred_fallthru
        _
      %p170 = scmp.lt.s32.totalorder %s16, 2
      // Predicated region
      $region21: #{projection_head.1} parent=5 // pred_check
        %p171 = pneg %p170
      $region22: #{projection_head.1} parent=5 // pred_check_branch
        %173 = sbr.rel (%p171) target = $region24
      $region23: #{projection_head.1} parent=5 // pred_region
        // Predicated region
        $region25: #{projection_head.1} parent=23 // pred_check
          %p174 = pneg %p48
        $region26: #{projection_head.1} parent=23 // pred_check_branch
          %176 = sbr.rel (%p174) target = $region28
        $region27: #{projection_head.1} parent=23 // pred_region
          %s177 = sand.u32 %s38, 1
          %s178 = scalar_lea.sflag [#allocation3], %s177
          %s179 = sand.u32 %s38, 1
          %s180 = smul.addr %s179, 64
          %s181 = scalar_lea.vmem [#allocation2], %s180
          %s182 = smul.u32 4, %s24
          %s184 = ssub.s32 1024, 1024
          %185 = vsyncadd %s178, %s184
          %s186 = smul.addr %s182, 2
          %s187 = smul.addr %s186, 128
          %s188 = scalar_lea.hbm %s0, %s187
          %s189 = sshll.u32 %s181, 4
          %s190 = int_to_ptr.vmem [resolvable:$true] %s189
          %195 = dma.hbm_to_vmem [thread:$0]  %s188, 1024, %s190, %s178, 256, 256, 16
        $region28: #{projection_head.1} parent=23 // pred_fallthru
          _
      $region24: #{projection_head.1} parent=5 // pred_fallthru
        _
      %p196 = scmp.le.s32.totalorder 1, %s16
      %p197 = scmp.lt.s32.totalorder %s16, 3
      %p198 = pnand %p196, %p197
      %p199 = pneg %p198
      // Predicated region
      $region29: #{projection_head.1} parent=5 // pred_check
        _
      $region30: #{projection_head.1} parent=5 // pred_check_branch
        %201 = sbr.rel (%p198) target = $region32
      $region31: #{projection_head.1} parent=5 // pred_region
        %s202 = ssub.s32 %s16, 1
        %s203 = sand.u32 %s41, 1
        %s204 = scalar_lea.sflag [#allocation3], %s203
        %s205 = sand.u32 %s41, 1
        %s206 = smul.addr %s205, 64
        %s207 = scalar_lea.vmem [#allocation2], %s206
        // Predicated region
        $region33: #{projection_head.1} parent=31 // pred_check
          %p208 = pneg %p54
        $region34: #{projection_head.1} parent=31 // pred_check_branch
          %210 = sbr.rel (%p208) target = $region36
        $region35: #{projection_head.1} parent=31 // pred_region
          %211 = dma.done %s204, 1024
        $region36: #{projection_head.1} parent=31 // pred_fallthru
          _
        // Predicated region
        $region37: #{projection_head.1} parent=31 // pred_check
          %p212 = pneg %p80
        $region38: #{projection_head.1} parent=31 // pred_check_branch
          %214 = sbr.rel (%p212) target = $region40
        $region39: #{projection_head.1} parent=31 // pred_region
          %215 = dma.done [#allocation6], 4096
        $region40: #{projection_head.1} parent=31 // pred_fallthru
          _
        %s216 = sand.u32 %s41, 1
        %s217 = scalar_lea.sflag [#allocation3], %s216
        %s218 = sand.u32 %s41, 1
        %s219 = smul.addr %s218, 64
        %s220 = scalar_lea.vmem [#allocation2], %s219
        %p221 = pneg %p54
        %p222 = pneg %p51
        %p223 = pneg %p80
        %p224 = pneg %p77
        %p225 = scmp.lt.s32.totalorder %s25, 0
        %s226 = scalar_select %p225, %s25, 0
        %s227 = scalar_lea.vmem %s2, %s226
        %p228 = pneg %p106
        %p229 = pneg %p103
        %p230 = pneg %p134
        %p231 = pneg %p131
        %s232 = sand.u32 %s121, 1
        %s233 = scalar_lea.sflag [#allocation4], %s232
        %s234 = sand.u32 %s121, 1
        %s235 = smul.addr %s234, 32
        %s236 = scalar_lea.vmem [#allocation7], %s235
        %s237 = smul.u32 4, %s26
        %p238 = scmp.lt.s32.totalorder %s25, 0
        %s239 = scalar_select %p238, %s25, 0
        %s240 = scalar_lea.vmem %s2, %s239
        %s241 = smul.u32 4, %s26
        %v242 = vld [vmem:[%s207] sm:$0xff]
        %v243 = vld [vmem:[%s207 + $0x8] sm:$0xff]
        %v244 = vld [vmem:[%s207 + $0x10] sm:$0xff]
        %v245 = vld [vmem:[%s207 + $0x18] sm:$0xff]
        %v246 = vld [vmem:[%s207 + $0x20] sm:$0xff]
        %v247 = vld [vmem:[%s207 + $0x28] sm:$0xff]
        %v248 = vld [vmem:[%s207 + $0x30] sm:$0xff]
        %v249 = vld [vmem:[%s207 + $0x38] sm:$0xff]
        %v250 = vld [vmem:[#allocation5] sm:$0xff]
        %v251 = vld [vmem:[#allocation5 + $0x8] sm:$0xff]
        %v252 = vld [vmem:[#allocation5 + $0x10] sm:$0xff]
        %v253 = vld [vmem:[#allocation5 + $0x18] sm:$0xff]
        %v254 = vld [vmem:[#allocation5 + $0x20] sm:$0xff]
        %v255 = vld [vmem:[#allocation5 + $0x28] sm:$0xff]
        %v256 = vld [vmem:[#allocation5 + $0x30] sm:$0xff]
        %v257 = vld [vmem:[#allocation5 + $0x38] sm:$0xff]
        %v258 = vld [vmem:[#allocation5 + $0x40] sm:$0xff]
        %v259 = vld [vmem:[#allocation5 + $0x48] sm:$0xff]
        %v260 = vld [vmem:[#allocation5 + $0x50] sm:$0xff]
        %v261 = vld [vmem:[#allocation5 + $0x58] sm:$0xff]
        %v262 = vld [vmem:[#allocation5 + $0x60] sm:$0xff]
        %v263 = vld [vmem:[#allocation5 + $0x68] sm:$0xff]
        %v264 = vld [vmem:[#allocation5 + $0x70] sm:$0xff]
        %v265 = vld [vmem:[#allocation5 + $0x78] sm:$0xff]
        %v266 = vld [vmem:[#allocation5 + $0x80] sm:$0xff]
        %v267 = vld [vmem:[#allocation5 + $0x88] sm:$0xff]
        %v268 = vld [vmem:[#allocation5 + $0x90] sm:$0xff]
        %v269 = vld [vmem:[#allocation5 + $0x98] sm:$0xff]
        %v270 = vld [vmem:[#allocation5 + $0xa0] sm:$0xff]
        %v271 = vld [vmem:[#allocation5 + $0xa8] sm:$0xff]
        %v272 = vld [vmem:[#allocation5 + $0xb0] sm:$0xff]
        %v273 = vld [vmem:[#allocation5 + $0xb8] sm:$0xff]
        %v274 = vld [vmem:[#allocation5 + $0xc0] sm:$0xff]
        %v275 = vld [vmem:[#allocation5 + $0xc8] sm:$0xff]
        %v276 = vld [vmem:[#allocation5 + $0xd0] sm:$0xff]
        %v277 = vld [vmem:[#allocation5 + $0xd8] sm:$0xff]
        %v278 = vld [vmem:[#allocation5 + $0xe0] sm:$0xff]
        %v279 = vld [vmem:[#allocation5 + $0xe8] sm:$0xff]
        %v280 = vld [vmem:[#allocation5 + $0xf0] sm:$0xff]
        %v281 = vld [vmem:[#allocation5 + $0xf8] sm:$0xff]
        %v282 = vld [vmem:[%s240] sm:$0x1]
        %v284 = vlaneseq
        %v285 = vshrl.u32 %v284, 7
        %v286 = vsub.s32 0, %v285
        %v287 = vrot.slane %v282, %v286
        %289 = vmatprep.subr.mxu0 0.0
        %290 = vmatpush1.msra.mxu0 %v250
        %291 = vmatprep.subr.mxu0 0.0
        %292 = vmatpush1.msra.mxu0 %v251
        %293 = vmatprep.subr.mxu0 0.0
        %294 = vmatpush1.msra.mxu0 %v252
        %295 = vmatprep.subr.mxu0 0.0
        %296 = vmatpush1.msra.mxu0 %v253
        %297 = vmatprep.subr.mxu0 0.0
        %298 = vmatpush1.msra.mxu0 %v254
        %299 = vmatprep.subr.mxu0 0.0
        %300 = vmatpush1.msra.mxu0 %v255
        %301 = vmatprep.subr.mxu0 0.0
        %302 = vmatpush1.msra.mxu0 %v256
        %303 = vmatprep.subr.mxu0 0.0
        %304 = vmatpush1.msra.mxu0 %v257
        %305 = vmatprep.subr.mxu0 0.0
        %306 = vmatpush1.msra.mxu0 %v258
        %307 = vmatprep.subr.mxu0 0.0
        %308 = vmatpush1.msra.mxu0 %v259
        %309 = vmatprep.subr.mxu0 0.0
        %310 = vmatpush1.msra.mxu0 %v260
        %311 = vmatprep.subr.mxu0 0.0
        %312 = vmatpush1.msra.mxu0 %v261
        %313 = vmatprep.subr.mxu0 0.0
        %314 = vmatpush1.msra.mxu0 %v262
        %315 = vmatprep.subr.mxu0 0.0
        %316 = vmatpush1.msra.mxu0 %v263
        %317 = vmatprep.subr.mxu0 0.0
        %318 = vmatpush1.msra.mxu0 %v264
        %319 = vmatprep.subr.mxu0 0.0
        %320 = vmatpush1.msra.mxu0 %v265
        %321 = vmatprep.subr.mxu0 0.0
        %322 = vmatpush1.msra.mxu0 %v266
        %323 = vmatprep.subr.mxu0 0.0
        %324 = vmatpush1.msra.mxu0 %v267
        %325 = vmatprep.subr.mxu0 0.0
        %326 = vmatpush1.msra.mxu0 %v268
        %327 = vmatprep.subr.mxu0 0.0
        %328 = vmatpush1.msra.mxu0 %v269
        %329 = vmatprep.subr.mxu0 0.0
        %330 = vmatpush1.msra.mxu0 %v270
        %331 = vmatprep.subr.mxu0 0.0
        %332 = vmatpush1.msra.mxu0 %v271
        %333 = vmatprep.subr.mxu0 0.0
        %334 = vmatpush1.msra.mxu0 %v272
        %335 = vmatprep.subr.mxu0 0.0
        %336 = vmatpush1.msra.mxu0 %v273
        %337 = vmatprep.subr.mxu0 0.0
        %338 = vmatpush1.msra.mxu0 %v274
        %339 = vmatprep.subr.mxu0 0.0
        %340 = vmatpush1.msra.mxu0 %v275
        %341 = vmatprep.subr.mxu0 0.0
        %342 = vmatpush1.msra.mxu0 %v276
        %343 = vmatprep.subr.mxu0 0.0
        %344 = vmatpush1.msra.mxu0 %v277
        %345 = vmatprep.subr.mxu0 0.0
        %346 = vmatpush1.msra.mxu0 %v278
        %347 = vmatprep.subr.mxu0 0.0
        %348 = vmatpush1.msra.mxu0 %v279
        %349 = vmatprep.subr.mxu0 0.0
        %350 = vmatpush1.msra.mxu0 %v280
        %351 = vmatprep.subr.mxu0 0.0
        %352 = vmatpush1.msra.mxu0 %v281
        %353 = vmatprep.mubr.f32.mxu0 %v243
        %354 = vmatmul.mubr.f32.gmra.mrb[0].mxu0 %v242
        %v355 = vpop.f32.mrb[0].mxu0
        %v356 = vadd.f32 %v287, %v355
        %v357 = vpop.f32.mrb[0].mxu0
        %358 = vmatprep.mubr.f32.mxu0 %v245
        %359 = vmatmul.mubr.f32.gmra.mrb[0].mxu0 %v244
        %v360 = vpop.f32.mrb[0].mxu0
        %v361 = vadd.f32 %v287, %v360
        %v362 = vpop.f32.mrb[0].mxu0
        %363 = vmatprep.mubr.f32.mxu0 %v247
        %364 = vmatmul.mubr.f32.gmra.mrb[0].mxu0 %v246
        %v365 = vpop.f32.mrb[0].mxu0
        %v366 = vadd.f32 %v287, %v365
        %v367 = vpop.f32.mrb[0].mxu0
        %368 = vmatprep.mubr.f32.mxu0 %v249
        %369 = vmatmul.mubr.f32.gmra.mrb[0].mxu0 %v248
        %v370 = vpop.f32.mrb[0].mxu0
        %v371 = vadd.f32 %v287, %v370
        %v372 = vpop.f32.mrb[0].mxu0
        %373 = vdwg.mxu0
        %374 = vst [vmem:[%s236] sm:$0xff] %v356
        %375 = vst [vmem:[%s236 + $0x8] sm:$0xff] %v361
        %376 = vst [vmem:[%s236 + $0x10] sm:$0xff] %v366
        %377 = vst [vmem:[%s236 + $0x18] sm:$0xff] %v371
        %s378 = sand.u32 %s121, 1
        %s379 = scalar_lea.sflag [#allocation4], %s378
        %s380 = sand.u32 %s121, 1
        %s381 = smul.addr %s380, 32
        %s382 = scalar_lea.vmem [#allocation7], %s381
        // Predicated region
        $region41: #{projection_head.1} parent=31 // pred_check
          %p383 = pneg %p131
        $region42: #{projection_head.1} parent=31 // pred_check_branch
          %385 = sbr.rel (%p383) target = $region44
        $region43: #{projection_head.1} parent=31 // pred_region
          %s386 = smul.u32 4, %s26
          %s388 = ssub.s32 512, 512
          %389 = vsyncadd %s379, %s388
          %s390 = sadd.s32 %s25, %s386
          %s391 = smul.addr %s390, 128
          %s392 = scalar_lea.hbm %s3, %s391
          %s393 = sshll.u32 %s382, 4
          %s394 = int_to_ptr.vmem [resolvable:$true] %s393
          %399 = dma.vmem_to_hbm [thread:$0]  %s394, 512, %s392, %s379, 128, 128, 8
        $region44: #{projection_head.1} parent=31 // pred_fallthru
          _
      $region32: #{projection_head.1} parent=5 // pred_fallthru
        _
      %p400 = scmp.le.s32.totalorder 2, %s16
      // Predicated region
      $region45: #{projection_head.1} parent=5 // pred_check
        %p401 = pneg %p400
      $region46: #{projection_head.1} parent=5 // pred_check_branch
        %403 = sbr.rel (%p401) target = $region48
      $region47: #{projection_head.1} parent=5 // pred_region
        %s404 = ssub.s32 %s16, 2
        // Predicated region
        $region49: #{projection_head.1} parent=47 // pred_check
          %p405 = pneg %p137
        $region50: #{projection_head.1} parent=47 // pred_check_branch
          %407 = sbr.rel (%p405) target = $region52
        $region51: #{projection_head.1} parent=47 // pred_region
          %s408 = sand.u32 %s122, 1
          %s409 = scalar_lea.sflag [#allocation4], %s408
          %s410 = sand.u32 %s122, 1
          %s411 = smul.addr %s410, 32
          %s412 = scalar_lea.vmem [#allocation7], %s411
          %413 = dma.done %s409, 512
        $region52: #{projection_head.1} parent=47 // pred_fallthru
          _
      $region48: #{projection_head.1} parent=5 // pred_fallthru
        _
    $region6: #{projection_head.1} parent=1 // loop_footer
      %s20 = sadd.s32 1, %s16
    $region7: #{projection_head.1} parent=1 // loop_footer_branch
      %15 = sbr.rel target = $region3
    $region8: #{projection_head.1} parent=1 // loop_exit
      _
    %414 = vsyncpa [#allocation3], 1
    %s415 = scalar_lea.sflag [#allocation3], 1
    %416 = vsyncpa %s415, 1
    %417 = vsyncpa [#allocation6], 1
    %418 = vsyncpa [#allocation4], 1
    %s419 = scalar_lea.sflag [#allocation4], 1
    %420 = vsyncpa %s419, 1

</llo_original>
